<compile_context>
chip_gen: v5e
topology: v5e:2x2
jax: 0.10.0
libtpu: 0.0.40
codegen_flags: <defaults>
</compile_context>

<pallas_src>
import functools

import jax
import jax.numpy as jnp
from jax import lax
from jax.experimental import pallas as pl
from jax.experimental.pallas import tpu as pltpu

EPS = 1e-5


# ------------------------- Pallas kernel -------------------------

def _conv_bn_prelu_pool_kernel(p_ref, w_ref, b_ref, a_ref, o_ref):
    """One (image, M-tile) step of fused conv + BN + PReLU (+ 2x2 maxpool).

    p_ref: (1, T, K, TM) bf16  im2col patches; T = 4 pooling taps (or 1 if no pool).
    w_ref: (Cout, K)     bf16  conv weight with the BN scale folded in.
    b_ref: (Cout, 1)     f32   folded conv-bias + BN shift.
    a_ref: (1,)          f32   PReLU alpha (SMEM scalar).
    o_ref: (1, Cout, TM) f32   lane-dense output tile (channels-major -> NCHW for free).
    """
    alpha = a_ref[0]
    bias = b_ref[...]
    n_taps = p_ref.shape[1]
    out = None
    for t in range(n_taps):  # static unroll (1 or 4)
        acc = jnp.dot(w_ref[...], p_ref[0, t],
                      preferred_element_type=jnp.float32)      # (Cout, TM) on the MXU
        y = acc + bias                                          # folded conv-bias + BN
        y = jnp.where(y > 0, y, alpha * y)                      # PReLU
        out = y if out is None else jnp.maximum(out, y)         # fused 2x2 maxpool
    o_ref[0] = out


# ------------------------- glue / wrapper -------------------------

def _round_up(x, m):
    return ((x + m - 1) // m) * m


@functools.partial(jax.jit, static_argnames=("kernel_size", "stride", "padding", "pool"))
def sface_block(x_nchw, params, *, kernel_size, stride, padding, pool):
    w = params["conv_w"]          # (Cout, Cin, KH, KW)  (PyTorch layout)
    conv_b = params["conv_b"]     # (Cout,)
    gamma = params["bn_gamma"]
    beta = params["bn_beta"]
    rmean = params["bn_mean"]
    rvar = params["bn_var"]
    alpha = params["prelu_a"].astype(jnp.float32)   # (1,)

    Cout, Cin, KH, KW = w.shape
    N, _, H, W = x_nchw.shape
    s = stride
    OH = (H + 2 * padding - KH) // s + 1
    OW = (W + 2 * padding - KW) // s + 1

    # Fold conv bias + eval-mode BN into the weights (scale) and a single bias (shift).
    inv_std = lax.rsqrt(rvar.astype(jnp.float32) + EPS)
    scale = gamma.astype(jnp.float32) * inv_std                               # (Cout,)
    bias = ((conv_b.astype(jnp.float32) - rmean.astype(jnp.float32)) * scale
            + beta.astype(jnp.float32)).reshape(Cout, 1)                      # f32
    K = KH * KW * Cin
    w_mat = (jnp.transpose(w.astype(jnp.float32), (0, 2, 3, 1)).reshape(Cout, K)
             * scale[:, None]).astype(jnp.bfloat16)                           # (Cout, K)

    # Spatially pad input, cast once to bf16 (halves im2col HBM traffic).
    xpad = jnp.pad(x_nchw.astype(jnp.bfloat16),
                   ((0, 0), (0, 0), (padding, padding), (padding, padding)))

    if pool:
        nh, nw = OH // 2, OW // 2          # MaxPool2d(2) floor semantics
        offsets = [(0, 0), (0, 1), (1, 0), (1, 1)]
        step = 2 * s
    else:
        nh, nw = OH, OW
        offsets = [(0, 0)]
        step = s
    T = len(offsets)
    M = nh * nw

    # im2col in bf16, directly in pooled-tap order: patches[n, t, (i*KW+j)*Cin+c, r*nw+q]
    tap_groups = []
    for dr, dc in offsets:
        taps = []
        for i in range(KH):
            for j in range(KW):
                i0 = dr * s + i
                j0 = dc * s + j
                taps.append(xpad[:, :,
                                 i0: i0 + step * (nh - 1) + 1: step,
                                 j0: j0 + step * (nw - 1) + 1: step])  # (N, Cin, nh, nw)
        tg = jnp.stack(taps, axis=1)                  # (N, KH*KW, Cin, nh, nw)
        tap_groups.append(tg.reshape(N, K, M))
    patches = jnp.stack(tap_groups, axis=1)           # (N, T, K, M)  bf16

    # Pick the M tile: as large as possible (amortize per-step overhead) under a
    # conservative VMEM budget (double-buffered bf16 patches + f32 output per column),
    # so it also fits v7x's 64 MiB VMEM / 32 MiB scoped default.
    vmem_budget = 16 * 1024 * 1024
    bytes_per_col = 4 * T * K + 8 * Cout
    tm_cap = max(128, min(2048, vmem_budget // max(bytes_per_col, 1)))
    n_tiles = max(1, -(-M // tm_cap))
    TM = _round_up(-(-M // n_tiles), 128)
    M_pad = n_tiles * TM
    if M_pad > M:
        patches = jnp.pad(patches, ((0, 0), (0, 0), (0, 0), (0, M_pad - M)))

    out = pl.pallas_call(
        _conv_bn_prelu_pool_kernel,
        out_shape=jax.ShapeDtypeStruct((N, Cout, M_pad), jnp.float32),
        grid=(N, n_tiles),
        in_specs=[
            pl.BlockSpec((1, T, K, TM), lambda n, m: (n, 0, 0, m)),
            pl.BlockSpec((Cout, K), lambda n, m: (0, 0)),
            pl.BlockSpec((Cout, 1), lambda n, m: (0, 0)),
            pl.BlockSpec(memory_space=pltpu.MemorySpace.SMEM),
        ],
        out_specs=pl.BlockSpec((1, Cout, TM), lambda n, m: (n, 0, m)),
        compiler_params=pltpu.CompilerParams(
            dimension_semantics=("parallel", "parallel")),
    )(patches, w_mat, bias, alpha)

    # Channels-major output -> NCHW reshape is free (no transpose pass).
    return out[:, :, :M].reshape(N, Cout, nh, nw)


# ------------------------- reference (plain JAX) -------------------------

def sface_block_ref(x_nchw, params, *, kernel_size, stride, padding, pool):
    w = params["conv_w"].astype(jnp.float32)
    y = lax.conv_general_dilated(
        x_nchw.astype(jnp.float32), w, (stride, stride),
        [(padding, padding), (padding, padding)],
        dimension_numbers=("NCHW", "OIHW", "NCHW"),
    ) + params["conv_b"].reshape(1, -1, 1, 1)
    inv_std = lax.rsqrt(params["bn_var"] + EPS).reshape(1, -1, 1, 1)
    y = (y - params["bn_mean"].reshape(1, -1, 1, 1)) * inv_std * \
        params["bn_gamma"].reshape(1, -1, 1, 1) + params["bn_beta"].reshape(1, -1, 1, 1)
    a = params["prelu_a"][0]
    y = jnp.where(y > 0, y, a * y)
    if pool:
        y = lax.reduce_window(y, -jnp.inf, lax.max, (1, 1, 2, 2), (1, 1, 2, 2), "VALID")
    return y


# ------------------------- main -------------------------

if __name__ == "__main__":
    in_channels, out_channels = 4, 8
    kernel_size, stride, padding, pool = 3, 1, 1, True
    N, H, W = 2, 16, 16

    key = jax.random.PRNGKey(0)
    ks = jax.random.split(key, 8)
    params = {
        "conv_w": 0.1 * jax.random.normal(ks[0], (out_channels, in_channels, kernel_size, kernel_size), jnp.float32),
        "conv_b": 0.1 * jax.random.normal(ks[1], (out_channels,), jnp.float32),
        "bn_gamma": 1.0 + 0.1 * jax.random.normal(ks[2], (out_channels,), jnp.float32),
        "bn_beta": 0.1 * jax.random.normal(ks[3], (out_channels,), jnp.float32),
        "bn_mean": 0.05 * jax.random.normal(ks[4], (out_channels,), jnp.float32),
        "bn_var": 1.0 + 0.1 * jax.random.uniform(ks[5], (out_channels,), jnp.float32),
        "prelu_a": jnp.array([0.25], jnp.float32),  # nn.PReLU() default
    }
    x = jax.random.normal(ks[6], (N, in_channels, H, W), jnp.float32)

    out = sface_block(x, params, kernel_size=kernel_size, stride=stride,
                      padding=padding, pool=pool)
    out = jax.block_until_ready(out)

    ref = sface_block_ref(x, params, kernel_size=kernel_size, stride=stride,
                          padding=padding, pool=pool)
    assert out.shape == ref.shape, (out.shape, ref.shape)
    assert jnp.allclose(out, ref, atol=2e-2, rtol=2e-2), float(jnp.max(jnp.abs(out - ref)))

    print("KERNEL_OK")
</pallas_src>

<mosaic_0001>
module attributes {stable_mosaic.version = 11 : i64} {
  func.func @_conv_bn_prelu_pool_kernel(%arg0: i32, %arg1: i32, %arg2: memref<1x4x36x128xbf16, #tpu.memory_space<vmem>>, %arg3: memref<8x36xbf16, #tpu.memory_space<vmem>>, %arg4: memref<8x1xf32, #tpu.memory_space<vmem>>, %arg5: memref<1xf32, #tpu.memory_space<smem>>, %arg6: memref<1x8x128xf32, #tpu.memory_space<vmem>>) attributes {dimension_semantics = [#tpu.dimension_semantics<parallel>, #tpu.dimension_semantics<parallel>], iteration_bounds = array<i64: 2, 1>, scalar_prefetch = 0 : i64, scratch_operands = 0 : i64, tpu.core_type = #tpu.core_type<tc>, window_params = [{transform_indices = @transform_0, window_bounds = array<i64: 1, 4, 36, 128>}, {pipeline_mode = #tpu.pipeline_mode<synchronous>, transform_indices = @transform_1, window_bounds = array<i64: 8, 36>}, {pipeline_mode = #tpu.pipeline_mode<synchronous>, transform_indices = @transform_2, window_bounds = array<i64: 8, 1>}, {transform_indices = @transform_3, window_bounds = array<i64: 1>}, {transform_indices = @transform_4, window_bounds = array<i64: 1, 8, 128>}]} {
    %c0 = arith.constant 0 : index
    %0 = memref.load %arg5[%c0] : memref<1xf32, #tpu.memory_space<smem>>
    %c0_0 = arith.constant 0 : index
    %c0_1 = arith.constant 0 : index
    %1 = vector.load %arg4[%c0_0, %c0_1] : memref<8x1xf32, #tpu.memory_space<vmem>>, vector<8x1xf32>
    %c0_2 = arith.constant 0 : index
    %c0_3 = arith.constant 0 : index
    %2 = vector.load %arg3[%c0_2, %c0_3] : memref<8x36xbf16, #tpu.memory_space<vmem>>, vector<8x36xbf16>
    %c0_4 = arith.constant 0 : index
    %c0_5 = arith.constant 0 : index
    %c0_6 = arith.constant 0 : index
    %c0_7 = arith.constant 0 : index
    %3 = vector.load %arg2[%c0_4, %c0_5, %c0_6, %c0_7] : memref<1x4x36x128xbf16, #tpu.memory_space<vmem>>, vector<1x1x36x128xbf16>
    %4 = vector.shape_cast %3 : vector<1x1x36x128xbf16> to vector<36x128xbf16>
    %cst = arith.constant dense<0.000000e+00> : vector<8x128xf32>
    %5 = tpu.matmul %2, %4, %cst {dimension_numbers = #tpu.dot_dimension_numbers<[1], [0], [0], [1], [0, 0, 1, 1], [], []>} : vector<8x36xbf16>, vector<36x128xbf16>, vector<8x128xf32> -> vector<8x128xf32>
    %6 = vector.broadcast %1 : vector<8x1xf32> to vector<8x128xf32>
    %7 = arith.addf %5, %6 : vector<8x128xf32>
    %cst_8 = arith.constant 0.000000e+00 : f32
    %8 = vector.broadcast %cst_8 : f32 to vector<8x128xf32>
    %9 = arith.cmpf ogt, %7, %8 : vector<8x128xf32>
    %10 = vector.broadcast %0 : f32 to vector<8x128xf32>
    %11 = arith.mulf %10, %7 : vector<8x128xf32>
    %12 = arith.select %9, %7, %11 : vector<8x128xi1>, vector<8x128xf32>
    %c0_9 = arith.constant 0 : index
    %c0_10 = arith.constant 0 : index
    %13 = vector.load %arg3[%c0_9, %c0_10] : memref<8x36xbf16, #tpu.memory_space<vmem>>, vector<8x36xbf16>
    %c0_11 = arith.constant 0 : index
    %c1 = arith.constant 1 : index
    %c0_12 = arith.constant 0 : index
    %c0_13 = arith.constant 0 : index
    %14 = vector.load %arg2[%c0_11, %c1, %c0_12, %c0_13] : memref<1x4x36x128xbf16, #tpu.memory_space<vmem>>, vector<1x1x36x128xbf16>
    %15 = vector.shape_cast %14 : vector<1x1x36x128xbf16> to vector<36x128xbf16>
    %cst_14 = arith.constant dense<0.000000e+00> : vector<8x128xf32>
    %16 = tpu.matmul %13, %15, %cst_14 {dimension_numbers = #tpu.dot_dimension_numbers<[1], [0], [0], [1], [0, 0, 1, 1], [], []>} : vector<8x36xbf16>, vector<36x128xbf16>, vector<8x128xf32> -> vector<8x128xf32>
    %17 = vector.broadcast %1 : vector<8x1xf32> to vector<8x128xf32>
    %18 = arith.addf %16, %17 : vector<8x128xf32>
    %cst_15 = arith.constant 0.000000e+00 : f32
    %19 = vector.broadcast %cst_15 : f32 to vector<8x128xf32>
    %20 = arith.cmpf ogt, %18, %19 : vector<8x128xf32>
    %21 = vector.broadcast %0 : f32 to vector<8x128xf32>
    %22 = arith.mulf %21, %18 : vector<8x128xf32>
    %23 = arith.select %20, %18, %22 : vector<8x128xi1>, vector<8x128xf32>
    %24 = arith.maximumf %12, %23 : vector<8x128xf32>
    %c0_16 = arith.constant 0 : index
    %c0_17 = arith.constant 0 : index
    %25 = vector.load %arg3[%c0_16, %c0_17] : memref<8x36xbf16, #tpu.memory_space<vmem>>, vector<8x36xbf16>
    %c0_18 = arith.constant 0 : index
    %c2 = arith.constant 2 : index
    %c0_19 = arith.constant 0 : index
    %c0_20 = arith.constant 0 : index
    %26 = vector.load %arg2[%c0_18, %c2, %c0_19, %c0_20] : memref<1x4x36x128xbf16, #tpu.memory_space<vmem>>, vector<1x1x36x128xbf16>
    %27 = vector.shape_cast %26 : vector<1x1x36x128xbf16> to vector<36x128xbf16>
    %cst_21 = arith.constant dense<0.000000e+00> : vector<8x128xf32>
    %28 = tpu.matmul %25, %27, %cst_21 {dimension_numbers = #tpu.dot_dimension_numbers<[1], [0], [0], [1], [0, 0, 1, 1], [], []>} : vector<8x36xbf16>, vector<36x128xbf16>, vector<8x128xf32> -> vector<8x128xf32>
    %29 = vector.broadcast %1 : vector<8x1xf32> to vector<8x128xf32>
    %30 = arith.addf %28, %29 : vector<8x128xf32>
    %cst_22 = arith.constant 0.000000e+00 : f32
    %31 = vector.broadcast %cst_22 : f32 to vector<8x128xf32>
    %32 = arith.cmpf ogt, %30, %31 : vector<8x128xf32>
    %33 = vector.broadcast %0 : f32 to vector<8x128xf32>
    %34 = arith.mulf %33, %30 : vector<8x128xf32>
    %35 = arith.select %32, %30, %34 : vector<8x128xi1>, vector<8x128xf32>
    %36 = arith.maximumf %24, %35 : vector<8x128xf32>
    %c0_23 = arith.constant 0 : index
    %c0_24 = arith.constant 0 : index
    %37 = vector.load %arg3[%c0_23, %c0_24] : memref<8x36xbf16, #tpu.memory_space<vmem>>, vector<8x36xbf16>
    %c0_25 = arith.constant 0 : index
    %c3 = arith.constant 3 : index
    %c0_26 = arith.constant 0 : index
    %c0_27 = arith.constant 0 : index
    %38 = vector.load %arg2[%c0_25, %c3, %c0_26, %c0_27] : memref<1x4x36x128xbf16, #tpu.memory_space<vmem>>, vector<1x1x36x128xbf16>
    %39 = vector.shape_cast %38 : vector<1x1x36x128xbf16> to vector<36x128xbf16>
    %cst_28 = arith.constant dense<0.000000e+00> : vector<8x128xf32>
    %40 = tpu.matmul %37, %39, %cst_28 {dimension_numbers = #tpu.dot_dimension_numbers<[1], [0], [0], [1], [0, 0, 1, 1], [], []>} : vector<8x36xbf16>, vector<36x128xbf16>, vector<8x128xf32> -> vector<8x128xf32>
    %41 = vector.broadcast %1 : vector<8x1xf32> to vector<8x128xf32>
    %42 = arith.addf %40, %41 : vector<8x128xf32>
    %cst_29 = arith.constant 0.000000e+00 : f32
    %43 = vector.broadcast %cst_29 : f32 to vector<8x128xf32>
    %44 = arith.cmpf ogt, %42, %43 : vector<8x128xf32>
    %45 = vector.broadcast %0 : f32 to vector<8x128xf32>
    %46 = arith.mulf %45, %42 : vector<8x128xf32>
    %47 = arith.select %44, %42, %46 : vector<8x128xi1>, vector<8x128xf32>
    %48 = arith.maximumf %36, %47 : vector<8x128xf32>
    %c0_30 = arith.constant 0 : index
    %c0_31 = arith.constant 0 : index
    %c0_32 = arith.constant 0 : index
    %49 = vector.load %arg6[%c0_30, %c0_31, %c0_32] : memref<1x8x128xf32, #tpu.memory_space<vmem>>, vector<1x8x128xf32>
    %50 = vector.shape_cast %49 : vector<1x8x128xf32> to vector<8x128xf32>
    %51 = vector.shape_cast %48 : vector<8x128xf32> to vector<1x8x128xf32>
    tpu.vector_store %arg6[%c0_30, %c0_31, %c0_32], %51 {strides = array<i32>} : memref<1x8x128xf32, #tpu.memory_space<vmem>>, vector<1x8x128xf32>,
    return
  }
  func.func @transform_0(%arg0: i32, %arg1: i32) -> (i32, i32, i32, i32) {
    %c0_i32 = arith.constant 0 : i32
    %c0_i32_0 = arith.constant 0 : i32
    %c0_i32_1 = arith.constant 0 : i32
    return %arg0, %c0_i32, %c0_i32_0, %arg1 : i32, i32, i32, i32
  }
  func.func @transform_1(%arg0: i32, %arg1: i32) -> (i32, i32) {
    %c0_i32 = arith.constant 0 : i32
    %c0_i32_0 = arith.constant 0 : i32
    %c0_i32_1 = arith.constant 0 : i32
    return %c0_i32, %c0_i32_0 : i32, i32
  }
  func.func @transform_2(%arg0: i32, %arg1: i32) -> (i32, i32) {
    %c0_i32 = arith.constant 0 : i32
    %c0_i32_0 = arith.constant 0 : i32
    %c0_i32_1 = arith.constant 0 : i32
    return %c0_i32, %c0_i32_0 : i32, i32
  }
  func.func @transform_3(%arg0: i32, %arg1: i32) -> i32 {
    %c0_i32 = arith.constant 0 : i32
    %c0_i32_0 = arith.constant 0 : i32
    return %c0_i32 : i32
  }
  func.func @transform_4(%arg0: i32, %arg1: i32) -> (i32, i32, i32) {
    %c0_i32 = arith.constant 0 : i32
    %c0_i32_0 = arith.constant 0 : i32
    return %arg0, %c0_i32, %arg1 : i32, i32, i32
  }
}

</mosaic_0001>

<llo_original>
// kernel: sface_block.1
$region0: #{sface_block.1}
  #allocation0 [shape = 'u32[]', space=smem, size = 0x4, offset = 0x4, fixed_abs, tag = 'smem constant byte address 0x4 - core index']
  #allocation1 [shape = 'u32[72,128]{1,0:T(1,128)}', space=vmem, size = 0x9000, scoped, tag = 'internal scratch']
  #allocation2 [shape = 'f32[1]{0:T(128)S(6)}', space=smem, size = 0x200, scoped, tag = 'scoped memory for sface_block.1']
  %s0 = inlined_call_operand.vmem [shape: bf16[2,4,36,128], index: 0, kind: input, shape index: {}]
  %s1 = inlined_call_operand.vmem [shape: bf16[8,36], index: 1, kind: input, shape index: {}]
  %s2 = inlined_call_operand.vmem [shape: f32[8,1], index: 2, kind: input, shape index: {}]
  %s3 = inlined_call_operand.<no memory space> [shape: f32[1], index: 3, kind: input, shape index: {}]
  %s4 = inlined_call_operand.vmem [shape: f32[2,8,128], index: 4, kind: output, shape index: {}]
  %s5 = sld [smem:[#allocation0]]
  $region49: #{sface_block.1} parent=0
    _
  %s7 = ssub.s32 1, %s5
  %s8 = scalar_select 0, %s7, %s5
  %9 = sst [smem:[#allocation2]] %s3
  loop: start=0, step=1, limit=4
  $region2: #{sface_block.1} parent=0 // loop_pre_header
    _
  $region3: #{sface_block.1} parent=0 // loop_header
    %s11 = sphi 0, %s15
    %p12 = scmp.ge.s32.totalorder %s11, 4
    %s18 = sphi 0, %s30
    %s19 = sphi 0, %s26
    %s20 = sphi 0, %s18
    %s21 = sphi 0, %s19
    %s22 = sphi 0, %s20
    %s23 = sphi 0, %s21
    %s35 = sphi 0, %s37
    %s38 = sphi 0, %s35
    %s39 = sphi 0, %s38
    %s55 = sphi 0, %s39
    %s59 = sphi 0, %s59
    %s61 = sphi 0, %s59
    %s62 = sphi 0, %s61
    %s76 = sphi 0, %s62
    %s80 = sphi 0, %s80
    %s82 = sphi 0, %s80
    %s83 = sphi 0, %s82
    %s97 = sphi 0, %s83
    %s101 = sphi 0, %s101
    %s103 = sphi 0, %s101
    %s104 = sphi 0, %s103
    %s118 = sphi 0, %s104
    %s126 = sphi 0, %s128
    %s129 = sphi 0, %s126
    %s130 = sphi 0, %s129
    %s146 = sphi 0, %s130
  $region4: #{sface_block.1} parent=0 // loop_header_branch
    %14 = sbr.rel (%p12) target = $region8
  $region5: #{sface_block.1} parent=0 // loop_body
    %s16 = ssub.s32 %s11, 1
    %s17 = ssub.s32 %s11, 2
    %s24 = sadd.s32 1, %s19
    %p25 = scmp.ge.s32.totalorder %s24, 1
    %s26 = scalar_select %p25, 0, %s24
    %s27 = sadd.s32 1, %s18
    %s28 = scalar_select %p25, %s27, %s18
    %p29 = scmp.ge.s32.totalorder %s28, 2
    %s30 = scalar_select %p29, 0, %s28
    %s31 = ssub.s32 %s18, %s30
    %s32 = ssub.s32 %s19, %s26
    %s33 = sor.u32 %s31, %s32
    %p34 = scmp.eq.s32.totalorder %s33, 0
    %s36 = sadd.s32 %s35, 1
    %s37 = scalar_select %p34, %s35, %s36
    %p40 = pneg %p34
    %p41 = scmp.eq.s32.totalorder %s11, 1
    %p42 = por %p40, %p41
    %p43 = scmp.ne.s32.totalorder %s35, %s38
    %p44 = scmp.eq.s32.totalorder %s11, 0
    %p45 = por %p43, %p44
    %p46 = scmp.ne.s32.totalorder %s35, %s38
    %p47 = scmp.eq.s32.totalorder %s16, 1
    %p48 = por %p46, %p47
    %p49 = scmp.ne.s32.totalorder %s38, %s39
    %p50 = scmp.eq.s32.totalorder %s16, 0
    %p51 = por %p49, %p50
    %p52 = scmp.ne.s32.totalorder %s38, %s39
    %p53 = scmp.eq.s32.totalorder %s17, 1
    %p54 = por %p52, %p53
    %p56 = scmp.ne.s32.totalorder %s39, %s55
    %p57 = scmp.eq.s32.totalorder %s17, 0
    %p58 = por %p56, %p57
    %s60 = sadd.s32 %s59, 1
    %p63 = scmp.eq.s32.totalorder %s11, 1
    %p64 = scmp.ne.s32.totalorder %s59, %s61
    %p65 = scmp.eq.s32.totalorder %s11, 0
    %p66 = por %p64, %p65
    %p67 = scmp.ne.s32.totalorder %s59, %s61
    %p68 = scmp.eq.s32.totalorder %s16, 1
    %p69 = por %p67, %p68
    %p70 = scmp.ne.s32.totalorder %s61, %s62
    %p71 = scmp.eq.s32.totalorder %s16, 0
    %p72 = por %p70, %p71
    %p73 = scmp.ne.s32.totalorder %s61, %s62
    %p74 = scmp.eq.s32.totalorder %s17, 1
    %p75 = por %p73, %p74
    %p77 = scmp.ne.s32.totalorder %s62, %s76
    %p78 = scmp.eq.s32.totalorder %s17, 0
    %p79 = por %p77, %p78
    %s81 = sadd.s32 %s80, 1
    %p84 = scmp.eq.s32.totalorder %s11, 1
    %p85 = scmp.ne.s32.totalorder %s80, %s82
    %p86 = scmp.eq.s32.totalorder %s11, 0
    %p87 = por %p85, %p86
    %p88 = scmp.ne.s32.totalorder %s80, %s82
    %p89 = scmp.eq.s32.totalorder %s16, 1
    %p90 = por %p88, %p89
    %p91 = scmp.ne.s32.totalorder %s82, %s83
    %p92 = scmp.eq.s32.totalorder %s16, 0
    %p93 = por %p91, %p92
    %p94 = scmp.ne.s32.totalorder %s82, %s83
    %p95 = scmp.eq.s32.totalorder %s17, 1
    %p96 = por %p94, %p95
    %p98 = scmp.ne.s32.totalorder %s83, %s97
    %p99 = scmp.eq.s32.totalorder %s17, 0
    %p100 = por %p98, %p99
    %s102 = sadd.s32 %s101, 1
    %p105 = scmp.eq.s32.totalorder %s11, 1
    %p106 = scmp.ne.s32.totalorder %s101, %s103
    %p107 = scmp.eq.s32.totalorder %s11, 0
    %p108 = por %p106, %p107
    %p109 = scmp.ne.s32.totalorder %s101, %s103
    %p110 = scmp.eq.s32.totalorder %s16, 1
    %p111 = por %p109, %p110
    %p112 = scmp.ne.s32.totalorder %s103, %s104
    %p113 = scmp.eq.s32.totalorder %s16, 0
    %p114 = por %p112, %p113
    %p115 = scmp.ne.s32.totalorder %s103, %s104
    %p116 = scmp.eq.s32.totalorder %s17, 1
    %p117 = por %p115, %p116
    %p119 = scmp.ne.s32.totalorder %s104, %s118
    %p120 = scmp.eq.s32.totalorder %s17, 0
    %p121 = por %p119, %p120
    %s122 = ssub.s32 %s18, %s30
    %s123 = ssub.s32 %s19, %s26
    %s124 = sor.u32 %s122, %s123
    %p125 = scmp.eq.s32.totalorder %s124, 0
    %s127 = sadd.s32 %s126, 1
    %s128 = scalar_select %p125, %s126, %s127
    %p131 = pneg %p125
    %p132 = scmp.eq.s32.totalorder %s11, 1
    %p133 = por %p131, %p132
    %p134 = scmp.ne.s32.totalorder %s126, %s129
    %p135 = scmp.eq.s32.totalorder %s11, 0
    %p136 = por %p134, %p135
    %p137 = scmp.ne.s32.totalorder %s126, %s129
    %p138 = scmp.eq.s32.totalorder %s16, 1
    %p139 = por %p137, %p138
    %p140 = scmp.ne.s32.totalorder %s129, %s130
    %p141 = scmp.eq.s32.totalorder %s16, 0
    %p142 = por %p140, %p141
    %p143 = scmp.ne.s32.totalorder %s129, %s130
    %p144 = scmp.eq.s32.totalorder %s17, 1
    %p145 = por %p143, %p144
    %p147 = scmp.ne.s32.totalorder %s130, %s146
    %p148 = scmp.eq.s32.totalorder %s17, 0
    %p149 = por %p147, %p148
    %p150 = scmp.le.s32.totalorder 1, %s11
    %p151 = scmp.lt.s32.totalorder %s11, 3
    %p152 = pnand %p150, %p151
    %p153 = pneg %p152
    // Predicated region
    $region9: #{sface_block.1} parent=5 // pred_check
      _
    $region10: #{sface_block.1} parent=5 // pred_check_branch
      %155 = sbr.rel (%p152) target = $region12
    $region11: #{sface_block.1} parent=5 // pred_region
      %s156 = ssub.s32 %s11, 1
      // Predicated region
      $region13: #{sface_block.1} parent=11 // pred_check
        %p157 = pneg %p72
      $region14: #{sface_block.1} parent=11 // pred_check_branch
        %159 = sbr.rel (%p157) target = $region16
      $region15: #{sface_block.1} parent=11 // pred_region
        _
      $region16: #{sface_block.1} parent=11 // pred_fallthru
        _
      // Predicated region
      $region17: #{sface_block.1} parent=11 // pred_check
        %p160 = pneg %p93
      $region18: #{sface_block.1} parent=11 // pred_check_branch
        %162 = sbr.rel (%p160) target = $region20
      $region19: #{sface_block.1} parent=11 // pred_region
        _
      $region20: #{sface_block.1} parent=11 // pred_fallthru
        _
      // Predicated region
      $region21: #{sface_block.1} parent=11 // pred_check
        %p163 = pneg %p114
      $region22: #{sface_block.1} parent=11 // pred_check_branch
        %165 = sbr.rel (%p163) target = $region24
      $region23: #{sface_block.1} parent=11 // pred_region
        _
      $region24: #{sface_block.1} parent=11 // pred_fallthru
        _
    $region12: #{sface_block.1} parent=5 // pred_fallthru
      _
    %p166 = scmp.lt.s32.totalorder %s11, 2
    // Predicated region
    $region25: #{sface_block.1} parent=5 // pred_check
      %p167 = pneg %p166
    $region26: #{sface_block.1} parent=5 // pred_check_branch
      %169 = sbr.rel (%p167) target = $region28
    $region27: #{sface_block.1} parent=5 // pred_region
      // Predicated region
      $region29: #{sface_block.1} parent=27 // pred_check
        %p170 = pneg %p45
      $region30: #{sface_block.1} parent=27 // pred_check_branch
        %172 = sbr.rel (%p170) target = $region32
      $region31: #{sface_block.1} parent=27 // pred_region
        %p173 = scmp.lt.s32.totalorder %s18, 1
        %s174 = scalar_select %p173, %s18, 1
        %p175 = scmp.lt.s32.totalorder %s19, 0
        %s176 = scalar_select %p175, %s19, 0
        %s177 = smul.addr %s174, 20
        %s178 = sadd.s32 %s176, %s177
        %s179 = smul.addr %s178, 4
        %s180 = scalar_lea.vmem %s0, %s179
      $region32: #{sface_block.1} parent=27 // pred_fallthru
        _
    $region28: #{sface_block.1} parent=5 // pred_fallthru
      _
    %p181 = scmp.le.s32.totalorder 1, %s11
    %p182 = scmp.lt.s32.totalorder %s11, 3
    %p183 = pnand %p181, %p182
    %p184 = pneg %p183
    // Predicated region
    $region33: #{sface_block.1} parent=5 // pred_check
      _
    $region34: #{sface_block.1} parent=5 // pred_check_branch
      %186 = sbr.rel (%p183) target = $region36
    $region35: #{sface_block.1} parent=5 // pred_region
      %s187 = ssub.s32 %s11, 1
      %p188 = scmp.lt.s32.totalorder %s20, 1
      %s189 = scalar_select %p188, %s20, 1
      %p190 = scmp.lt.s32.totalorder %s21, 0
      %s191 = scalar_select %p190, %s21, 0
      %s192 = smul.addr %s189, 20
      %s193 = sadd.s32 %s191, %s192
      %s194 = smul.addr %s193, 4
      %s195 = scalar_lea.vmem %s0, %s194
      %p196 = pneg %p51
      %p197 = pneg %p48
      %p198 = pneg %p72
      %p199 = pneg %p69
      %p200 = pneg %p93
      %p201 = pneg %p90
      %p202 = pneg %p114
      %p203 = pneg %p111
      %p204 = pneg %p142
      %p205 = pneg %p139
      %p206 = scmp.lt.s32.totalorder %s20, 1
      %s207 = scalar_select %p206, %s20, 1
      %p208 = scmp.lt.s32.totalorder %s21, 0
      %s209 = scalar_select %p208, %s21, 0
      %s210 = sadd.s32 %s209, %s207
      %s211 = smul.addr %s210, 8
      %s212 = scalar_lea.vmem %s4, %s211
      %p213 = scmp.lt.s32.totalorder %s20, 1
      %s214 = scalar_select %p213, %s20, 1
      %p215 = scmp.lt.s32.totalorder %s21, 0
      %s216 = scalar_select %p215, %s21, 0
      %s217 = smul.addr %s214, 20
      %s218 = sadd.s32 %s216, %s217
      %s219 = smul.addr %s218, 4
      %s220 = scalar_lea.vmem %s0, %s219
      %p221 = scmp.lt.s32.totalorder %s20, 1
      %s222 = scalar_select %p221, %s20, 1
      %p223 = scmp.lt.s32.totalorder %s21, 0
      %s224 = scalar_select %p223, %s21, 0
      %s225 = sadd.s32 %s224, %s222
      %s226 = smul.addr %s225, 8
      %s227 = scalar_lea.vmem %s4, %s226
      %s229 = sld [smem:[#allocation2]]
      %v230 = vld [vmem:[%s2] sm:$0xff]
      %v231 = vld [vmem:[%s1] sm:$0xf]
      %v232 = vld [vmem:[%s220] sm:$0xf]
      %v233 = vld [vmem:[%s220 + $0x4] sm:$0xf]
      %v234 = vld [vmem:[%s220 + $0x8] sm:$0xf]
      %v235 = vld [vmem:[%s220 + $0xc] sm:$0xf]
      %v236 = vld [vmem:[%s220 + $0x10] sm:$0x3]
      %238 = vset.pattern.permute.xlu0 0
      %239 = vperm.xlu0 %238, %v230
      %v240 = vpop.permute.xlu0 %239
      %v247 = vunpack.c.l.b16 %v232
      %v248 = vunpack.c.l.b16 %v233
      %v249 = vunpack.c.l.b16 %v234
      %v250 = vunpack.c.l.b16 %v235
      %v251 = vunpack.c.l.b16 %v236
      %v252 = vpack.c.b16 %v248, %v247
      %v253 = vpack.c.b16 %v250, %v249
      %v254 = vpack.c.b16 %v251, %v251
      %vm257 = vcmask 293888
      %v259 = vsel %vm257, %v231, 0
      %vm261 = vcmask 1041408
      %v263 = vsel %vm261, %v254, 0
      %265 = vmatpush.bf16.msra.mxu0 0
      %266 = vmatpush.bf16.msra.mxu0 0
      %267 = vmatpush.bf16.msra.mxu0 0
      %268 = vmatpush.bf16.msra.mxu0 0
      %269 = vmatpush.bf16.msra.mxu0 0
      %270 = vmatpush.bf16.msra.mxu0 %v263
      %271 = vmatpush.bf16.msra.mxu0 %v253
      %272 = vmatpush.bf16.msra.mxu0 %v252
      %273 = vmatmul.bf16.gmra.mxu0 %v259
      %v274 = vpop.f32.mrf.mxu0
      %v275 = vadd.f32 %v240, %v274
      %v276 = vpop.f32.mrf.mxu0
      %277 = vdwg.mxu0
      %vm278 = vcmp.gt.f32.partialorder %v275, 0.0
      %v279 = vstv %s229
      %v280 = vmul.f32 %v279, %v275
      %v281 = vsel %vm278, %v275, %v280
      %s282 = scalar_lea.vmem %s220, 20
      %v283 = vld [vmem:[%s282] sm:$0xf]
      %v284 = vld [vmem:[%s282 + $0x4] sm:$0xf]
      %v285 = vld [vmem:[%s282 + $0x8] sm:$0xf]
      %v286 = vld [vmem:[%s282 + $0xc] sm:$0xf]
      %v287 = vld [vmem:[%s282 + $0x10] sm:$0x3]
      %v293 = vunpack.c.l.b16 %v283
      %v294 = vunpack.c.l.b16 %v284
      %v295 = vunpack.c.l.b16 %v285
      %v296 = vunpack.c.l.b16 %v286
      %v297 = vunpack.c.l.b16 %v287
      %v298 = vpack.c.b16 %v294, %v293
      %v299 = vpack.c.b16 %v296, %v295
      %v300 = vpack.c.b16 %v297, %v297
      %v304 = vsel %vm261, %v300, 0
      %306 = vmatpush.bf16.msra.mxu0 0
      %307 = vmatpush.bf16.msra.mxu0 0
      %308 = vmatpush.bf16.msra.mxu0 0
      %309 = vmatpush.bf16.msra.mxu0 0
      %310 = vmatpush.bf16.msra.mxu0 0
      %311 = vmatpush.bf16.msra.mxu0 %v304
      %312 = vmatpush.bf16.msra.mxu0 %v299
      %313 = vmatpush.bf16.msra.mxu0 %v298
      %314 = vmatmul.bf16.gmra.mxu0 %v259
      %v315 = vpop.f32.mrf.mxu0
      %v316 = vadd.f32 %v240, %v315
      %v317 = vpop.f32.mrf.mxu0
      %318 = vdwg.mxu0
      %vm319 = vcmp.gt.f32.partialorder %v316, 0.0
      %v320 = vmul.f32 %v279, %v316
      %v321 = vsel %vm319, %v316, %v320
      %v322 = vmax.f32 %v281, %v321
      %s323 = scalar_lea.vmem %s220, 40
      %v324 = vld [vmem:[%s323] sm:$0xf]
      %v325 = vld [vmem:[%s323 + $0x4] sm:$0xf]
      %v326 = vld [vmem:[%s323 + $0x8] sm:$0xf]
      %v327 = vld [vmem:[%s323 + $0xc] sm:$0xf]
      %v328 = vld [vmem:[%s323 + $0x10] sm:$0x3]
      %v334 = vunpack.c.l.b16 %v324
      %v335 = vunpack.c.l.b16 %v325
      %v336 = vunpack.c.l.b16 %v326
      %v337 = vunpack.c.l.b16 %v327
      %v338 = vunpack.c.l.b16 %v328
      %v339 = vpack.c.b16 %v335, %v334
      %v340 = vpack.c.b16 %v337, %v336
      %v341 = vpack.c.b16 %v338, %v338
      %v345 = vsel %vm261, %v341, 0
      %347 = vmatpush.bf16.msra.mxu0 0
      %348 = vmatpush.bf16.msra.mxu0 0
      %349 = vmatpush.bf16.msra.mxu0 0
      %350 = vmatpush.bf16.msra.mxu0 0
      %351 = vmatpush.bf16.msra.mxu0 0
      %352 = vmatpush.bf16.msra.mxu0 %v345
      %353 = vmatpush.bf16.msra.mxu0 %v340
      %354 = vmatpush.bf16.msra.mxu0 %v339
      %355 = vmatmul.bf16.gmra.mxu0 %v259
      %v356 = vpop.f32.mrf.mxu0
      %v357 = vadd.f32 %v240, %v356
      %v358 = vpop.f32.mrf.mxu0
      %359 = vdwg.mxu0
      %vm360 = vcmp.gt.f32.partialorder %v357, 0.0
      %v361 = vmul.f32 %v279, %v357
      %v362 = vsel %vm360, %v357, %v361
      %v363 = vmax.f32 %v322, %v362
      %s364 = scalar_lea.vmem %s220, 60
      %v365 = vld [vmem:[%s364] sm:$0xf]
      %v366 = vld [vmem:[%s364 + $0x4] sm:$0xf]
      %v367 = vld [vmem:[%s364 + $0x8] sm:$0xf]
      %v368 = vld [vmem:[%s364 + $0xc] sm:$0xf]
      %v369 = vld [vmem:[%s364 + $0x10] sm:$0x3]
      %v375 = vunpack.c.l.b16 %v365
      %v376 = vunpack.c.l.b16 %v366
      %v377 = vunpack.c.l.b16 %v367
      %v378 = vunpack.c.l.b16 %v368
      %v379 = vunpack.c.l.b16 %v369
      %v380 = vpack.c.b16 %v376, %v375
      %v381 = vpack.c.b16 %v378, %v377
      %v382 = vpack.c.b16 %v379, %v379
      %v386 = vsel %vm261, %v382, 0
      %388 = vmatpush.bf16.msra.mxu0 0
      %389 = vmatpush.bf16.msra.mxu0 0
      %390 = vmatpush.bf16.msra.mxu0 0
      %391 = vmatpush.bf16.msra.mxu0 0
      %392 = vmatpush.bf16.msra.mxu0 0
      %393 = vmatpush.bf16.msra.mxu0 %v386
      %394 = vmatpush.bf16.msra.mxu0 %v381
      %395 = vmatpush.bf16.msra.mxu0 %v380
      %396 = vmatmul.bf16.gmra.mxu0 %v259
      %v397 = vpop.f32.mrf.mxu0
      %v398 = vadd.f32 %v240, %v397
      %v399 = vpop.f32.mrf.mxu0
      %400 = vdwg.mxu0
      %vm401 = vcmp.gt.f32.partialorder %v398, 0.0
      %v402 = vmul.f32 %v279, %v398
      %v403 = vsel %vm401, %v398, %v402
      %v404 = vmax.f32 %v363, %v403
      %405 = vst [vmem:[%s227] sm:$0xff] %v404
      %p406 = scmp.lt.s32.totalorder %s20, 1
      %s407 = scalar_select %p406, %s20, 1
      %p408 = scmp.lt.s32.totalorder %s21, 0
      %s409 = scalar_select %p408, %s21, 0
      %s410 = sadd.s32 %s409, %s407
      %s411 = smul.addr %s410, 8
      %s412 = scalar_lea.vmem %s4, %s411
      // Predicated region
      $region37: #{sface_block.1} parent=35 // pred_check
        %p413 = pneg %p139
      $region38: #{sface_block.1} parent=35 // pred_check_branch
        %415 = sbr.rel (%p413) target = $region40
      $region39: #{sface_block.1} parent=35 // pred_region
        _
      $region40: #{sface_block.1} parent=35 // pred_fallthru
        _
    $region36: #{sface_block.1} parent=5 // pred_fallthru
      _
    %p416 = scmp.le.s32.totalorder 2, %s11
    // Predicated region
    $region41: #{sface_block.1} parent=5 // pred_check
      %p417 = pneg %p416
    $region42: #{sface_block.1} parent=5 // pred_check_branch
      %419 = sbr.rel (%p417) target = $region44
    $region43: #{sface_block.1} parent=5 // pred_region
      %s420 = ssub.s32 %s11, 2
      // Predicated region
      $region45: #{sface_block.1} parent=43 // pred_check
        %p421 = pneg %p145
      $region46: #{sface_block.1} parent=43 // pred_check_branch
        %423 = sbr.rel (%p421) target = $region48
      $region47: #{sface_block.1} parent=43 // pred_region
        %p424 = scmp.lt.s32.totalorder %s22, 1
        %s425 = scalar_select %p424, %s22, 1
        %p426 = scmp.lt.s32.totalorder %s23, 0
        %s427 = scalar_select %p426, %s23, 0
        %s428 = sadd.s32 %s427, %s425
        %s429 = smul.addr %s428, 8
        %s430 = scalar_lea.vmem %s4, %s429
      $region48: #{sface_block.1} parent=43 // pred_fallthru
        _
    $region44: #{sface_block.1} parent=5 // pred_fallthru
      _
  $region6: #{sface_block.1} parent=0 // loop_footer
    %s15 = sadd.s32 1, %s11
  $region7: #{sface_block.1} parent=0 // loop_footer_branch
    %10 = sbr.rel target = $region3
  $region8: #{sface_block.1} parent=0 // loop_exit
    _

</llo_original>
